<compile_context>
chip_gen: v5e
topology: v5e:2x2
jax: 0.10.0
libtpu: 0.0.40
codegen_flags: <defaults>
</compile_context>

<pallas_src>
import functools
import math

import jax
import jax.numpy as jnp
from jax.experimental import pallas as pl
from jax.experimental.pallas import tpu as pltpu


# ----------------------------------------------------------------------------
# Fused Pallas kernel: all GCN layers + JK-cat (folded) + Linear + log_softmax
# ----------------------------------------------------------------------------

def _jknet_fused_kernel(num_layers, x_ref, adj_ref, *rest):
    out_ref = rest[-1]
    prm = rest[:-1]
    # prm layout: [W0, b0, W1, b1, ..., W_{L-1}, b_{L-1}, Wlin(L,H,C), blin(1,C)]
    wlin_ref = prm[2 * num_layers]
    blin_ref = prm[2 * num_layers + 1]

    adj = adj_ref[...]                       # (N, N) normalized dense adjacency
    h = x_ref[...]                           # (N, C_in)

    # Accumulate the final Linear directly (JK 'cat' folded into weight slices).
    logits = jnp.zeros(out_ref.shape, jnp.float32) + blin_ref[...]

    for li in range(num_layers):
        w = prm[2 * li][...]                 # (C_in or H, H)
        b = prm[2 * li + 1][...]             # (1, H)
        hw = jnp.dot(h, w, preferred_element_type=jnp.float32)          # MXU
        h = jnp.dot(adj, hw, preferred_element_type=jnp.float32) + b    # MXU
        h = jnp.maximum(h, 0.0)              # ReLU
        # TODO(synk): F.dropout(p=dropout, training=False) is identity at inference.
        logits = logits + jnp.dot(h, wlin_ref[li],
                                  preferred_element_type=jnp.float32)

    # log_softmax epilogue (fused — no separate kernel / HBM round trip).
    m = jnp.max(logits, axis=-1, keepdims=True)
    z = logits - m
    lse = jnp.log(jnp.sum(jnp.exp(z), axis=-1, keepdims=True))
    out_ref[...] = z - lse


def jknet_forward_pallas(x, adj, params):
    convs = params["convs"]
    num_layers = len(convs)
    n = x.shape[0]
    hidden = convs[0]["W"].shape[1]
    c_out = params["lin"]["W"].shape[1]

    # Pre-reshape the classifier weight to (L, H, C_out): row-block l is the
    # slice that multiplies the l-th layer's output in the 'cat' jump.
    wlin = params["lin"]["W"].reshape(num_layers, hidden, c_out)
    blin = params["lin"]["b"].reshape(1, c_out)

    inputs = [x, adj]
    for p in convs:
        inputs.append(p["W"])
        inputs.append(p["b"].reshape(1, hidden))
    inputs.append(wlin)
    inputs.append(blin)

    kern = functools.partial(_jknet_fused_kernel, num_layers)
    return pl.pallas_call(
        kern,
        out_shape=jax.ShapeDtypeStruct((n, c_out), jnp.float32),
        in_specs=[pl.BlockSpec(memory_space=pltpu.MemorySpace.VMEM)] * len(inputs),
        out_specs=pl.BlockSpec(memory_space=pltpu.MemorySpace.VMEM),
    )(*inputs)


# ----------------------------------------------------------------------------
# Host-side graph preprocessing (mirrors adj_t_cache construction in forward)
# ----------------------------------------------------------------------------

def gcn_norm_dense(a):
    n = a.shape[0]
    eye = jnp.eye(n, dtype=a.dtype)
    a = a * (1.0 - eye) + eye                 # fill_diag(., 1.0) == add self loops
    deg = jnp.sum(a, axis=1)
    dinv = jnp.where(deg > 0, jax.lax.rsqrt(deg), 0.0)
    return a * dinv[:, None] * dinv[None, :]


# ----------------------------------------------------------------------------
# Parameters
# ----------------------------------------------------------------------------

def _glorot(key, shape):
    fan_in, fan_out = shape
    lim = math.sqrt(6.0 / (fan_in + fan_out))
    return jax.random.uniform(key, shape, jnp.float32, -lim, lim)


def make_jknet_params(key, in_channels, hidden, out_channels, num_layers):
    keys = jax.random.split(key, num_layers + 1)
    convs = []
    fin = in_channels
    for i in range(num_layers):
        convs.append({"W": _glorot(keys[i], (fin, hidden)),
                      "b": jnp.zeros((hidden,), jnp.float32)})
        fin = hidden
    lin = {"W": _glorot(keys[-1], (num_layers * hidden, out_channels)),
           "b": jnp.zeros((out_channels,), jnp.float32)}
    return {"convs": convs, "lin": lin}


# ----------------------------------------------------------------------------
# Pure-JAX reference (mirrors the kernel math) for a correctness sanity check
# ----------------------------------------------------------------------------

def _reference_forward(x, adj, params):
    xs = []
    h = x
    for p in params["convs"]:
        h = adj @ (h @ p["W"]) + p["b"]
        h = jax.nn.relu(h)
        xs.append(h)
    cat = jnp.concatenate(xs, axis=-1)                      # JumpingKnowledge 'cat'
    logits = cat @ params["lin"]["W"] + params["lin"]["b"]  # Linear
    return jax.nn.log_softmax(logits, axis=-1)


if __name__ == "__main__":
    # small shapes: 32 nodes, in=16, hidden=32, out=7, num_layers=3, 96 edges
    N, IN_C, HID, OUT_C, NUM_LAYERS, NUM_EDGES = 32, 16, 32, 7, 3, 96

    key = jax.random.PRNGKey(0)
    kx, ke1, ke2, kp = jax.random.split(key, 4)

    x = jax.random.normal(kx, (N, IN_C), jnp.float32)
    src = jax.random.randint(ke1, (NUM_EDGES,), 0, N)
    dst = jax.random.randint(ke2, (NUM_EDGES,), 0, N)

    # dense A from edge_index (values of 1 per edge, duplicates summed as in
    # torch_sparse.SparseTensor construction)
    adj_raw = jnp.zeros((N, N), jnp.float32).at[src, dst].add(1.0)
    adj_once = gcn_norm_dense(adj_raw)       # gcn_norm in JKNet.forward (cached)
    adj_norm = gcn_norm_dense(adj_once)      # GCNConv(normalize=True) re-normalizes

    params = make_jknet_params(kp, IN_C, HID, OUT_C, NUM_LAYERS)

    out = jknet_forward_pallas(x, adj_norm, params)
    out = jax.block_until_ready(out)

    ref = jax.block_until_ready(_reference_forward(x, adj_norm, params))
    assert out.shape == (N, OUT_C)
    assert jnp.allclose(out, ref, rtol=1e-3, atol=1e-3), "mismatch vs reference"

    print("KERNEL_OK")
</pallas_src>

<mosaic_0001>
module attributes {stable_mosaic.version = 11 : i64} {
  func.func @_jknet_fused_kernel(%arg0: memref<32x16xf32, #tpu.memory_space<vmem>>, %arg1: memref<32x32xf32, #tpu.memory_space<vmem>>, %arg2: memref<16x32xf32, #tpu.memory_space<vmem>>, %arg3: memref<1x32xf32, #tpu.memory_space<vmem>>, %arg4: memref<32x32xf32, #tpu.memory_space<vmem>>, %arg5: memref<1x32xf32, #tpu.memory_space<vmem>>, %arg6: memref<32x32xf32, #tpu.memory_space<vmem>>, %arg7: memref<1x32xf32, #tpu.memory_space<vmem>>, %arg8: memref<3x32x7xf32, #tpu.memory_space<vmem>>, %arg9: memref<1x7xf32, #tpu.memory_space<vmem>>, %arg10: memref<32x7xf32, #tpu.memory_space<vmem>>) attributes {dimension_semantics = [], scalar_prefetch = 0 : i64, scratch_operands = 0 : i64, tpu.core_type = #tpu.core_type<tc>} {
    %c0 = arith.constant 0 : index
    %c0_0 = arith.constant 0 : index
    %0 = vector.load %arg1[%c0, %c0_0] : memref<32x32xf32, #tpu.memory_space<vmem>>, vector<32x32xf32>
    %c0_1 = arith.constant 0 : index
    %c0_2 = arith.constant 0 : index
    %1 = vector.load %arg0[%c0_1, %c0_2] : memref<32x16xf32, #tpu.memory_space<vmem>>, vector<32x16xf32>
    %cst = arith.constant 0.000000e+00 : f32
    %2 = vector.broadcast %cst : f32 to vector<32x7xf32>
    %c0_3 = arith.constant 0 : index
    %c0_4 = arith.constant 0 : index
    %3 = vector.load %arg9[%c0_3, %c0_4] : memref<1x7xf32, #tpu.memory_space<vmem>>, vector<1x7xf32>
    %4 = vector.broadcast %3 : vector<1x7xf32> to vector<32x7xf32>
    %5 = arith.addf %2, %4 : vector<32x7xf32>
    %c0_5 = arith.constant 0 : index
    %c0_6 = arith.constant 0 : index
    %6 = vector.load %arg2[%c0_5, %c0_6] : memref<16x32xf32, #tpu.memory_space<vmem>>, vector<16x32xf32>
    %c0_7 = arith.constant 0 : index
    %c0_8 = arith.constant 0 : index
    %7 = vector.load %arg3[%c0_7, %c0_8] : memref<1x32xf32, #tpu.memory_space<vmem>>, vector<1x32xf32>
    %cst_9 = arith.constant dense<0.000000e+00> : vector<32x32xf32>
    %8 = tpu.matmul %1, %6, %cst_9 {dimension_numbers = #tpu.dot_dimension_numbers<[1], [0], [0], [1], [0, 0, 1, 1], [], []>} : vector<32x16xf32>, vector<16x32xf32>, vector<32x32xf32> -> vector<32x32xf32>
    %cst_10 = arith.constant dense<0.000000e+00> : vector<32x32xf32>
    %9 = tpu.matmul %0, %8, %cst_10 {dimension_numbers = #tpu.dot_dimension_numbers<[1], [0], [0], [1], [0, 0, 1, 1], [], []>} : vector<32x32xf32>, vector<32x32xf32>, vector<32x32xf32> -> vector<32x32xf32>
    %10 = vector.broadcast %7 : vector<1x32xf32> to vector<32x32xf32>
    %11 = arith.addf %9, %10 : vector<32x32xf32>
    %cst_11 = arith.constant 0.000000e+00 : f32
    %12 = vector.broadcast %cst_11 : f32 to vector<32x32xf32>
    %13 = arith.maximumf %11, %12 : vector<32x32xf32>
    %c0_12 = arith.constant 0 : index
    %c0_13 = arith.constant 0 : index
    %c0_14 = arith.constant 0 : index
    %14 = vector.load %arg8[%c0_12, %c0_13, %c0_14] : memref<3x32x7xf32, #tpu.memory_space<vmem>>, vector<1x32x7xf32>
    %15 = vector.shape_cast %14 : vector<1x32x7xf32> to vector<32x7xf32>
    %cst_15 = arith.constant dense<0.000000e+00> : vector<32x7xf32>
    %16 = tpu.matmul %13, %15, %cst_15 {dimension_numbers = #tpu.dot_dimension_numbers<[1], [0], [0], [1], [0, 0, 1, 1], [], []>} : vector<32x32xf32>, vector<32x7xf32>, vector<32x7xf32> -> vector<32x7xf32>
    %17 = arith.addf %5, %16 : vector<32x7xf32>
    %c0_16 = arith.constant 0 : index
    %c0_17 = arith.constant 0 : index
    %18 = vector.load %arg4[%c0_16, %c0_17] : memref<32x32xf32, #tpu.memory_space<vmem>>, vector<32x32xf32>
    %c0_18 = arith.constant 0 : index
    %c0_19 = arith.constant 0 : index
    %19 = vector.load %arg5[%c0_18, %c0_19] : memref<1x32xf32, #tpu.memory_space<vmem>>, vector<1x32xf32>
    %cst_20 = arith.constant dense<0.000000e+00> : vector<32x32xf32>
    %20 = tpu.matmul %13, %18, %cst_20 {dimension_numbers = #tpu.dot_dimension_numbers<[1], [0], [0], [1], [0, 0, 1, 1], [], []>} : vector<32x32xf32>, vector<32x32xf32>, vector<32x32xf32> -> vector<32x32xf32>
    %cst_21 = arith.constant dense<0.000000e+00> : vector<32x32xf32>
    %21 = tpu.matmul %0, %20, %cst_21 {dimension_numbers = #tpu.dot_dimension_numbers<[1], [0], [0], [1], [0, 0, 1, 1], [], []>} : vector<32x32xf32>, vector<32x32xf32>, vector<32x32xf32> -> vector<32x32xf32>
    %22 = vector.broadcast %19 : vector<1x32xf32> to vector<32x32xf32>
    %23 = arith.addf %21, %22 : vector<32x32xf32>
    %cst_22 = arith.constant 0.000000e+00 : f32
    %24 = vector.broadcast %cst_22 : f32 to vector<32x32xf32>
    %25 = arith.maximumf %23, %24 : vector<32x32xf32>
    %c1 = arith.constant 1 : index
    %c0_23 = arith.constant 0 : index
    %c0_24 = arith.constant 0 : index
    %26 = vector.load %arg8[%c1, %c0_23, %c0_24] : memref<3x32x7xf32, #tpu.memory_space<vmem>>, vector<1x32x7xf32>
    %27 = vector.shape_cast %26 : vector<1x32x7xf32> to vector<32x7xf32>
    %cst_25 = arith.constant dense<0.000000e+00> : vector<32x7xf32>
    %28 = tpu.matmul %25, %27, %cst_25 {dimension_numbers = #tpu.dot_dimension_numbers<[1], [0], [0], [1], [0, 0, 1, 1], [], []>} : vector<32x32xf32>, vector<32x7xf32>, vector<32x7xf32> -> vector<32x7xf32>
    %29 = arith.addf %17, %28 : vector<32x7xf32>
    %c0_26 = arith.constant 0 : index
    %c0_27 = arith.constant 0 : index
    %30 = vector.load %arg6[%c0_26, %c0_27] : memref<32x32xf32, #tpu.memory_space<vmem>>, vector<32x32xf32>
    %c0_28 = arith.constant 0 : index
    %c0_29 = arith.constant 0 : index
    %31 = vector.load %arg7[%c0_28, %c0_29] : memref<1x32xf32, #tpu.memory_space<vmem>>, vector<1x32xf32>
    %cst_30 = arith.constant dense<0.000000e+00> : vector<32x32xf32>
    %32 = tpu.matmul %25, %30, %cst_30 {dimension_numbers = #tpu.dot_dimension_numbers<[1], [0], [0], [1], [0, 0, 1, 1], [], []>} : vector<32x32xf32>, vector<32x32xf32>, vector<32x32xf32> -> vector<32x32xf32>
    %cst_31 = arith.constant dense<0.000000e+00> : vector<32x32xf32>
    %33 = tpu.matmul %0, %32, %cst_31 {dimension_numbers = #tpu.dot_dimension_numbers<[1], [0], [0], [1], [0, 0, 1, 1], [], []>} : vector<32x32xf32>, vector<32x32xf32>, vector<32x32xf32> -> vector<32x32xf32>
    %34 = vector.broadcast %31 : vector<1x32xf32> to vector<32x32xf32>
    %35 = arith.addf %33, %34 : vector<32x32xf32>
    %cst_32 = arith.constant 0.000000e+00 : f32
    %36 = vector.broadcast %cst_32 : f32 to vector<32x32xf32>
    %37 = arith.maximumf %35, %36 : vector<32x32xf32>
    %c2 = arith.constant 2 : index
    %c0_33 = arith.constant 0 : index
    %c0_34 = arith.constant 0 : index
    %38 = vector.load %arg8[%c2, %c0_33, %c0_34] : memref<3x32x7xf32, #tpu.memory_space<vmem>>, vector<1x32x7xf32>
    %39 = vector.shape_cast %38 : vector<1x32x7xf32> to vector<32x7xf32>
    %cst_35 = arith.constant dense<0.000000e+00> : vector<32x7xf32>
    %40 = tpu.matmul %37, %39, %cst_35 {dimension_numbers = #tpu.dot_dimension_numbers<[1], [0], [0], [1], [0, 0, 1, 1], [], []>} : vector<32x32xf32>, vector<32x7xf32>, vector<32x7xf32> -> vector<32x7xf32>
    %41 = arith.addf %29, %40 : vector<32x7xf32>
    %cst_36 = arith.constant dense<0xFF800000> : vector<32xf32>
    %42 = vector.multi_reduction <maximumf>, %41, %cst_36 [1] : vector<32x7xf32> to vector<32xf32>
    %43 = vector.shape_cast %42 : vector<32xf32> to vector<32x1xf32>
    %44 = vector.broadcast %43 : vector<32x1xf32> to vector<32x7xf32>
    %45 = arith.subf %41, %44 : vector<32x7xf32>
    %46 = math.exp %45 : vector<32x7xf32>
    %cst_37 = arith.constant dense<0.000000e+00> : vector<32xf32>
    %47 = vector.multi_reduction <add>, %46, %cst_37 [1] : vector<32x7xf32> to vector<32xf32>
    %48 = vector.shape_cast %47 : vector<32xf32> to vector<32x1xf32>
    %49 = math.log %48 : vector<32x1xf32>
    %50 = vector.broadcast %49 : vector<32x1xf32> to vector<32x7xf32>
    %51 = arith.subf %45, %50 : vector<32x7xf32>
    %c0_38 = arith.constant 0 : index
    %c0_39 = arith.constant 0 : index
    %52 = vector.load %arg10[%c0_38, %c0_39] : memref<32x7xf32, #tpu.memory_space<vmem>>, vector<32x7xf32>
    tpu.vector_store %arg10[%c0_38, %c0_39], %51 {strides = array<i32>} : memref<32x7xf32, #tpu.memory_space<vmem>>, vector<32x7xf32>,
    return
  }
}

</mosaic_0001>

<llo_original>
// kernel: tpu_custom_call.1
$region0: #{tpu_custom_call.1}
  #allocation0 [shape = 'u32[]', space=smem, size = 0x4, offset = 0x4, fixed_abs, tag = 'smem constant byte address 0x4 - core index']
  #allocation1 [shape = 'u32[72,128]{1,0:T(1,128)}', space=vmem, size = 0x9000, scoped, tag = 'internal scratch']
  %s0 = inlined_call_operand.vmem [shape: f32[32,16], index: 0, kind: input, shape index: {}]
  %s1 = inlined_call_operand.vmem [shape: f32[32,32], index: 1, kind: input, shape index: {}]
  %s2 = inlined_call_operand.vmem [shape: f32[16,32], index: 2, kind: input, shape index: {}]
  %s3 = inlined_call_operand.vmem [shape: f32[1,32], index: 3, kind: input, shape index: {}]
  %s4 = inlined_call_operand.vmem [shape: f32[32,32], index: 4, kind: input, shape index: {}]
  %s5 = inlined_call_operand.vmem [shape: f32[1,32], index: 5, kind: input, shape index: {}]
  %s6 = inlined_call_operand.vmem [shape: f32[32,32], index: 6, kind: input, shape index: {}]
  %s7 = inlined_call_operand.vmem [shape: f32[1,32], index: 7, kind: input, shape index: {}]
  %s8 = inlined_call_operand.vmem [shape: f32[3,32,7], index: 8, kind: input, shape index: {}]
  %s9 = inlined_call_operand.vmem [shape: f32[1,7], index: 9, kind: input, shape index: {}]
  %s10 = inlined_call_operand.vmem [shape: f32[32,7], index: 10, kind: output, shape index: {}]
  %s11 = sld [smem:[#allocation0]]
  $region50: #{tpu_custom_call.1} parent=0
    _
  %s13 = ssub.s32 1, %s11
  %s14 = scalar_select 0, %s13, %s11
  // Predicated region
  $region2: #{tpu_custom_call.1} parent=0 // pred_check
    _
  $region3: #{tpu_custom_call.1} parent=0 // pred_check_branch
    %16 = sbr.rel (0) target = $region5
  $region4: #{tpu_custom_call.1} parent=0 // pred_region
    _
  $region5: #{tpu_custom_call.1} parent=0 // pred_fallthru
    _
  // Predicated region
  $region6: #{tpu_custom_call.1} parent=0 // pred_check
    _
  $region7: #{tpu_custom_call.1} parent=0 // pred_check_branch
    %18 = sbr.rel (0) target = $region9
  $region8: #{tpu_custom_call.1} parent=0 // pred_region
    _
  $region9: #{tpu_custom_call.1} parent=0 // pred_fallthru
    _
  // Predicated region
  $region10: #{tpu_custom_call.1} parent=0 // pred_check
    _
  $region11: #{tpu_custom_call.1} parent=0 // pred_check_branch
    %20 = sbr.rel (0) target = $region13
  $region12: #{tpu_custom_call.1} parent=0 // pred_region
    _
  $region13: #{tpu_custom_call.1} parent=0 // pred_fallthru
    _
  // Predicated region
  $region14: #{tpu_custom_call.1} parent=0 // pred_check
    _
  $region15: #{tpu_custom_call.1} parent=0 // pred_check_branch
    %22 = sbr.rel (0) target = $region17
  $region16: #{tpu_custom_call.1} parent=0 // pred_region
    _
  $region17: #{tpu_custom_call.1} parent=0 // pred_fallthru
    _
  // Predicated region
  $region18: #{tpu_custom_call.1} parent=0 // pred_check
    _
  $region19: #{tpu_custom_call.1} parent=0 // pred_check_branch
    %24 = sbr.rel (0) target = $region21
  $region20: #{tpu_custom_call.1} parent=0 // pred_region
    _
  $region21: #{tpu_custom_call.1} parent=0 // pred_fallthru
    _
  // Predicated region
  $region22: #{tpu_custom_call.1} parent=0 // pred_check
    _
  $region23: #{tpu_custom_call.1} parent=0 // pred_check_branch
    %26 = sbr.rel (0) target = $region25
  $region24: #{tpu_custom_call.1} parent=0 // pred_region
    _
  $region25: #{tpu_custom_call.1} parent=0 // pred_fallthru
    _
  // Predicated region
  $region26: #{tpu_custom_call.1} parent=0 // pred_check
    _
  $region27: #{tpu_custom_call.1} parent=0 // pred_check_branch
    %28 = sbr.rel (0) target = $region29
  $region28: #{tpu_custom_call.1} parent=0 // pred_region
    _
  $region29: #{tpu_custom_call.1} parent=0 // pred_fallthru
    _
  // Predicated region
  $region30: #{tpu_custom_call.1} parent=0 // pred_check
    _
  $region31: #{tpu_custom_call.1} parent=0 // pred_check_branch
    %30 = sbr.rel (0) target = $region33
  $region32: #{tpu_custom_call.1} parent=0 // pred_region
    _
  $region33: #{tpu_custom_call.1} parent=0 // pred_fallthru
    _
  // Predicated region
  $region34: #{tpu_custom_call.1} parent=0 // pred_check
    _
  $region35: #{tpu_custom_call.1} parent=0 // pred_check_branch
    %32 = sbr.rel (0) target = $region37
  $region36: #{tpu_custom_call.1} parent=0 // pred_region
    _
  $region37: #{tpu_custom_call.1} parent=0 // pred_fallthru
    _
  // Predicated region
  $region38: #{tpu_custom_call.1} parent=0 // pred_check
    _
  $region39: #{tpu_custom_call.1} parent=0 // pred_check_branch
    %34 = sbr.rel (0) target = $region41
  $region40: #{tpu_custom_call.1} parent=0 // pred_region
    _
  $region41: #{tpu_custom_call.1} parent=0 // pred_fallthru
    _
  %v35 = vld [vmem:[%s1] sm:$0xff]
  %v36 = vld [vmem:[%s1 + $0x8] sm:$0xff]
  %v37 = vld [vmem:[%s1 + $0x10] sm:$0xff]
  %v38 = vld [vmem:[%s1 + $0x18] sm:$0xff]
  %v39 = vld [vmem:[%s0] sm:$0xff]
  %v40 = vld [vmem:[%s0 + $0x8] sm:$0xff]
  %v41 = vld [vmem:[%s0 + $0x10] sm:$0xff]
  %v42 = vld [vmem:[%s0 + $0x18] sm:$0xff]
  %v43 = vld [vmem:[%s9] sm:$0x1]
  %v45 = vperm.slane %v43, 0
  %v47 = vadd.f32 %v45, 0.0
  %v48 = vld [vmem:[%s2] sm:$0xff]
  %v49 = vld [vmem:[%s2 + $0x8] sm:$0xff]
  %v50 = vld [vmem:[%s3] sm:$0x1]
  %vm51 = vcmask 130048
  %v53 = vsel %vm51, %v39, 0
  %v56 = vsel %vm51, %v40, 0
  %v59 = vsel %vm51, %v41, 0
  %v62 = vsel %vm51, %v42, 0
  %64 = vmatpush.msra.mxu0 0.0
  %65 = vmatpush.msra.mxu0 0.0
  %66 = vmatpush.msra.mxu0 0.0
  %67 = vmatpush.msra.mxu0 0.0
  %68 = vmatpush.msra.mxu0 0.0
  %69 = vmatpush.msra.mxu0 0.0
  %70 = vmatpush.msra.mxu0 0.0
  %71 = vmatpush.msra.mxu0 0.0
  %72 = vmatpush.msra.mxu0 0.0
  %73 = vmatpush.msra.mxu0 0.0
  %74 = vmatpush.msra.mxu0 0.0
  %75 = vmatpush.msra.mxu0 0.0
  %76 = vmatpush.msra.mxu0 0.0
  %77 = vmatpush.msra.mxu0 0.0
  %78 = vmatpush.msra.mxu0 %v49
  %79 = vmatpush.msra.mxu0 %v48
  %80 = vmatmul.f32.gmra.mxu0 %v53
  %v81 = vpop.f32.mrf.mxu0
  %v82 = vadd.f32 0.0, %v81
  %83 = vmatmul.f32.gmra.mxu0 %v56
  %v84 = vpop.f32.mrf.mxu0
  %v85 = vadd.f32 0.0, %v84
  %86 = vmatmul.f32.gmra.mxu0 %v59
  %v87 = vpop.f32.mrf.mxu0
  %v88 = vadd.f32 0.0, %v87
  %89 = vmatmul.f32.gmra.mxu0 %v62
  %v90 = vpop.f32.mrf.mxu0
  %v91 = vadd.f32 0.0, %v90
  %92 = vdwg.mxu0
  %v94 = vperm.slane %v50, 0
  %vm96 = vcmask 261120
  %v98 = vsel %vm96, %v35, 0
  %v101 = vsel %vm96, %v36, 0
  %v104 = vsel %vm96, %v37, 0
  %v107 = vsel %vm96, %v38, 0
  %109 = vmatpush.msra.mxu0 0.0
  %110 = vmatpush.msra.mxu0 0.0
  %111 = vmatpush.msra.mxu0 0.0
  %112 = vmatpush.msra.mxu0 0.0
  %113 = vmatpush.msra.mxu0 0.0
  %114 = vmatpush.msra.mxu0 0.0
  %115 = vmatpush.msra.mxu0 0.0
  %116 = vmatpush.msra.mxu0 0.0
  %117 = vmatpush.msra.mxu0 0.0
  %118 = vmatpush.msra.mxu0 0.0
  %119 = vmatpush.msra.mxu0 0.0
  %120 = vmatpush.msra.mxu0 0.0
  %121 = vmatpush.msra.mxu0 %v91
  %122 = vmatpush.msra.mxu0 %v88
  %123 = vmatpush.msra.mxu0 %v85
  %124 = vmatpush.msra.mxu0 %v82
  %125 = vmatmul.f32.gmra.mxu0 %v98
  %v126 = vpop.f32.mrf.mxu0
  %v127 = vadd.f32 %v94, %v126
  %128 = vmatmul.f32.gmra.mxu0 %v101
  %v129 = vpop.f32.mrf.mxu0
  %v130 = vadd.f32 %v94, %v129
  %131 = vmatmul.f32.gmra.mxu0 %v104
  %v132 = vpop.f32.mrf.mxu0
  %v133 = vadd.f32 %v94, %v132
  %134 = vmatmul.f32.gmra.mxu0 %v107
  %v135 = vpop.f32.mrf.mxu0
  %v136 = vadd.f32 %v94, %v135
  %137 = vdwg.mxu0
  %v138 = vmax.f32 %v127, 0.0
  %v139 = vmax.f32 %v130, 0.0
  %v140 = vmax.f32 %v133, 0.0
  %v141 = vmax.f32 %v136, 0.0
  %v142 = vld [vmem:[%s8] sm:$0xff]
  %v143 = vld [vmem:[%s8 + $0x8] sm:$0xff]
  %v144 = vld [vmem:[%s8 + $0x10] sm:$0xff]
  %v145 = vld [vmem:[%s8 + $0x18] sm:$0xff]
  %v147 = vsel %vm96, %v138, 0
  %v150 = vsel %vm96, %v139, 0
  %v153 = vsel %vm96, %v140, 0
  %v156 = vsel %vm96, %v141, 0
  %158 = vmatpush.msra.mxu0 0.0
  %159 = vmatpush.msra.mxu0 0.0
  %160 = vmatpush.msra.mxu0 0.0
  %161 = vmatpush.msra.mxu0 0.0
  %162 = vmatpush.msra.mxu0 0.0
  %163 = vmatpush.msra.mxu0 0.0
  %164 = vmatpush.msra.mxu0 0.0
  %165 = vmatpush.msra.mxu0 0.0
  %166 = vmatpush.msra.mxu0 0.0
  %167 = vmatpush.msra.mxu0 0.0
  %168 = vmatpush.msra.mxu0 0.0
  %169 = vmatpush.msra.mxu0 0.0
  %170 = vmatpush.msra.mxu0 %v145
  %171 = vmatpush.msra.mxu0 %v144
  %172 = vmatpush.msra.mxu0 %v143
  %173 = vmatpush.msra.mxu0 %v142
  %174 = vmatmul.f32.gmra.mxu0 %v147
  %v175 = vpop.f32.mrf.mxu0
  %v176 = vadd.f32 0.0, %v175
  %177 = vmatmul.f32.gmra.mxu0 %v150
  %v178 = vpop.f32.mrf.mxu0
  %v179 = vadd.f32 0.0, %v178
  %180 = vmatmul.f32.gmra.mxu0 %v153
  %v181 = vpop.f32.mrf.mxu0
  %v182 = vadd.f32 0.0, %v181
  %183 = vmatmul.f32.gmra.mxu0 %v156
  %v184 = vpop.f32.mrf.mxu0
  %v185 = vadd.f32 0.0, %v184
  %186 = vdwg.mxu0
  %v187 = vadd.f32 %v47, %v176
  %v188 = vadd.f32 %v47, %v179
  %v189 = vadd.f32 %v47, %v182
  %v190 = vadd.f32 %v47, %v185
  %v191 = vld [vmem:[%s4] sm:$0xff]
  %v192 = vld [vmem:[%s4 + $0x8] sm:$0xff]
  %v193 = vld [vmem:[%s4 + $0x10] sm:$0xff]
  %v194 = vld [vmem:[%s4 + $0x18] sm:$0xff]
  %v195 = vld [vmem:[%s5] sm:$0x1]
  %196 = vmatpush.msra.mxu0 0.0
  %197 = vmatpush.msra.mxu0 0.0
  %198 = vmatpush.msra.mxu0 0.0
  %199 = vmatpush.msra.mxu0 0.0
  %200 = vmatpush.msra.mxu0 0.0
  %201 = vmatpush.msra.mxu0 0.0
  %202 = vmatpush.msra.mxu0 0.0
  %203 = vmatpush.msra.mxu0 0.0
  %204 = vmatpush.msra.mxu0 0.0
  %205 = vmatpush.msra.mxu0 0.0
  %206 = vmatpush.msra.mxu0 0.0
  %207 = vmatpush.msra.mxu0 0.0
  %208 = vmatpush.msra.mxu0 %v194
  %209 = vmatpush.msra.mxu0 %v193
  %210 = vmatpush.msra.mxu0 %v192
  %211 = vmatpush.msra.mxu0 %v191
  %212 = vmatmul.f32.gmra.mxu0 %v147
  %v213 = vpop.f32.mrf.mxu0
  %v214 = vadd.f32 0.0, %v213
  %215 = vmatmul.f32.gmra.mxu0 %v150
  %v216 = vpop.f32.mrf.mxu0
  %v217 = vadd.f32 0.0, %v216
  %218 = vmatmul.f32.gmra.mxu0 %v153
  %v219 = vpop.f32.mrf.mxu0
  %v220 = vadd.f32 0.0, %v219
  %221 = vmatmul.f32.gmra.mxu0 %v156
  %v222 = vpop.f32.mrf.mxu0
  %v223 = vadd.f32 0.0, %v222
  %224 = vdwg.mxu0
  %v226 = vperm.slane %v195, 0
  %228 = vmatpush.msra.mxu0 0.0
  %229 = vmatpush.msra.mxu0 0.0
  %230 = vmatpush.msra.mxu0 0.0
  %231 = vmatpush.msra.mxu0 0.0
  %232 = vmatpush.msra.mxu0 0.0
  %233 = vmatpush.msra.mxu0 0.0
  %234 = vmatpush.msra.mxu0 0.0
  %235 = vmatpush.msra.mxu0 0.0
  %236 = vmatpush.msra.mxu0 0.0
  %237 = vmatpush.msra.mxu0 0.0
  %238 = vmatpush.msra.mxu0 0.0
  %239 = vmatpush.msra.mxu0 0.0
  %240 = vmatpush.msra.mxu0 %v223
  %241 = vmatpush.msra.mxu0 %v220
  %242 = vmatpush.msra.mxu0 %v217
  %243 = vmatpush.msra.mxu0 %v214
  %244 = vmatmul.f32.gmra.mxu0 %v98
  %v245 = vpop.f32.mrf.mxu0
  %v246 = vadd.f32 %v226, %v245
  %247 = vmatmul.f32.gmra.mxu0 %v101
  %v248 = vpop.f32.mrf.mxu0
  %v249 = vadd.f32 %v226, %v248
  %250 = vmatmul.f32.gmra.mxu0 %v104
  %v251 = vpop.f32.mrf.mxu0
  %v252 = vadd.f32 %v226, %v251
  %253 = vmatmul.f32.gmra.mxu0 %v107
  %v254 = vpop.f32.mrf.mxu0
  %v255 = vadd.f32 %v226, %v254
  %256 = vdwg.mxu0
  %v257 = vmax.f32 %v246, 0.0
  %v258 = vmax.f32 %v249, 0.0
  %v259 = vmax.f32 %v252, 0.0
  %v260 = vmax.f32 %v255, 0.0
  %s261 = scalar_lea.vmem %s8, 32
  %v262 = vld [vmem:[%s261] sm:$0xff]
  %v263 = vld [vmem:[%s261 + $0x8] sm:$0xff]
  %v264 = vld [vmem:[%s261 + $0x10] sm:$0xff]
  %v265 = vld [vmem:[%s261 + $0x18] sm:$0xff]
  %v267 = vsel %vm96, %v257, 0
  %v270 = vsel %vm96, %v258, 0
  %v273 = vsel %vm96, %v259, 0
  %v276 = vsel %vm96, %v260, 0
  %278 = vmatpush.msra.mxu0 0.0
  %279 = vmatpush.msra.mxu0 0.0
  %280 = vmatpush.msra.mxu0 0.0
  %281 = vmatpush.msra.mxu0 0.0
  %282 = vmatpush.msra.mxu0 0.0
  %283 = vmatpush.msra.mxu0 0.0
  %284 = vmatpush.msra.mxu0 0.0
  %285 = vmatpush.msra.mxu0 0.0
  %286 = vmatpush.msra.mxu0 0.0
  %287 = vmatpush.msra.mxu0 0.0
  %288 = vmatpush.msra.mxu0 0.0
  %289 = vmatpush.msra.mxu0 0.0
  %290 = vmatpush.msra.mxu0 %v265
  %291 = vmatpush.msra.mxu0 %v264
  %292 = vmatpush.msra.mxu0 %v263
  %293 = vmatpush.msra.mxu0 %v262
  %294 = vmatmul.f32.gmra.mxu0 %v267
  %v295 = vpop.f32.mrf.mxu0
  %v296 = vadd.f32 0.0, %v295
  %297 = vmatmul.f32.gmra.mxu0 %v270
  %v298 = vpop.f32.mrf.mxu0
  %v299 = vadd.f32 0.0, %v298
  %300 = vmatmul.f32.gmra.mxu0 %v273
  %v301 = vpop.f32.mrf.mxu0
  %v302 = vadd.f32 0.0, %v301
  %303 = vmatmul.f32.gmra.mxu0 %v276
  %v304 = vpop.f32.mrf.mxu0
  %v305 = vadd.f32 0.0, %v304
  %306 = vdwg.mxu0
  %v307 = vadd.f32 %v187, %v296
  %v308 = vadd.f32 %v188, %v299
  %v309 = vadd.f32 %v189, %v302
  %v310 = vadd.f32 %v190, %v305
  %v311 = vld [vmem:[%s6] sm:$0xff]
  %v312 = vld [vmem:[%s6 + $0x8] sm:$0xff]
  %v313 = vld [vmem:[%s6 + $0x10] sm:$0xff]
  %v314 = vld [vmem:[%s6 + $0x18] sm:$0xff]
  %v315 = vld [vmem:[%s7] sm:$0x1]
  %316 = vmatpush.msra.mxu0 0.0
  %317 = vmatpush.msra.mxu0 0.0
  %318 = vmatpush.msra.mxu0 0.0
  %319 = vmatpush.msra.mxu0 0.0
  %320 = vmatpush.msra.mxu0 0.0
  %321 = vmatpush.msra.mxu0 0.0
  %322 = vmatpush.msra.mxu0 0.0
  %323 = vmatpush.msra.mxu0 0.0
  %324 = vmatpush.msra.mxu0 0.0
  %325 = vmatpush.msra.mxu0 0.0
  %326 = vmatpush.msra.mxu0 0.0
  %327 = vmatpush.msra.mxu0 0.0
  %328 = vmatpush.msra.mxu0 %v314
  %329 = vmatpush.msra.mxu0 %v313
  %330 = vmatpush.msra.mxu0 %v312
  %331 = vmatpush.msra.mxu0 %v311
  %332 = vmatmul.f32.gmra.mxu0 %v267
  %v333 = vpop.f32.mrf.mxu0
  %v334 = vadd.f32 0.0, %v333
  %335 = vmatmul.f32.gmra.mxu0 %v270
  %v336 = vpop.f32.mrf.mxu0
  %v337 = vadd.f32 0.0, %v336
  %338 = vmatmul.f32.gmra.mxu0 %v273
  %v339 = vpop.f32.mrf.mxu0
  %v340 = vadd.f32 0.0, %v339
  %341 = vmatmul.f32.gmra.mxu0 %v276
  %v342 = vpop.f32.mrf.mxu0
  %v343 = vadd.f32 0.0, %v342
  %344 = vdwg.mxu0
  %v346 = vperm.slane %v315, 0
  %348 = vmatpush.msra.mxu0 0.0
  %349 = vmatpush.msra.mxu0 0.0
  %350 = vmatpush.msra.mxu0 0.0
  %351 = vmatpush.msra.mxu0 0.0
  %352 = vmatpush.msra.mxu0 0.0
  %353 = vmatpush.msra.mxu0 0.0
  %354 = vmatpush.msra.mxu0 0.0
  %355 = vmatpush.msra.mxu0 0.0
  %356 = vmatpush.msra.mxu0 0.0
  %357 = vmatpush.msra.mxu0 0.0
  %358 = vmatpush.msra.mxu0 0.0
  %359 = vmatpush.msra.mxu0 0.0
  %360 = vmatpush.msra.mxu0 %v343
  %361 = vmatpush.msra.mxu0 %v340
  %362 = vmatpush.msra.mxu0 %v337
  %363 = vmatpush.msra.mxu0 %v334
  %364 = vmatmul.f32.gmra.mxu0 %v98
  %v365 = vpop.f32.mrf.mxu0
  %v366 = vadd.f32 %v346, %v365
  %367 = vmatmul.f32.gmra.mxu0 %v101
  %v368 = vpop.f32.mrf.mxu0
  %v369 = vadd.f32 %v346, %v368
  %370 = vmatmul.f32.gmra.mxu0 %v104
  %v371 = vpop.f32.mrf.mxu0
  %v372 = vadd.f32 %v346, %v371
  %373 = vmatmul.f32.gmra.mxu0 %v107
  %v374 = vpop.f32.mrf.mxu0
  %v375 = vadd.f32 %v346, %v374
  %376 = vdwg.mxu0
  %v377 = vmax.f32 %v366, 0.0
  %v378 = vmax.f32 %v369, 0.0
  %v379 = vmax.f32 %v372, 0.0
  %v380 = vmax.f32 %v375, 0.0
  %s381 = scalar_lea.vmem %s8, 64
  %v382 = vld [vmem:[%s381] sm:$0xff]
  %v383 = vld [vmem:[%s381 + $0x8] sm:$0xff]
  %v384 = vld [vmem:[%s381 + $0x10] sm:$0xff]
  %v385 = vld [vmem:[%s381 + $0x18] sm:$0xff]
  %v387 = vsel %vm96, %v377, 0
  %v390 = vsel %vm96, %v378, 0
  %v393 = vsel %vm96, %v379, 0
  %v396 = vsel %vm96, %v380, 0
  %398 = vmatpush.msra.mxu0 0.0
  %399 = vmatpush.msra.mxu0 0.0
  %400 = vmatpush.msra.mxu0 0.0
  %401 = vmatpush.msra.mxu0 0.0
  %402 = vmatpush.msra.mxu0 0.0
  %403 = vmatpush.msra.mxu0 0.0
  %404 = vmatpush.msra.mxu0 0.0
  %405 = vmatpush.msra.mxu0 0.0
  %406 = vmatpush.msra.mxu0 0.0
  %407 = vmatpush.msra.mxu0 0.0
  %408 = vmatpush.msra.mxu0 0.0
  %409 = vmatpush.msra.mxu0 0.0
  %410 = vmatpush.msra.mxu0 %v385
  %411 = vmatpush.msra.mxu0 %v384
  %412 = vmatpush.msra.mxu0 %v383
  %413 = vmatpush.msra.mxu0 %v382
  %414 = vmatmul.f32.gmra.mxu0 %v387
  %v415 = vpop.f32.mrf.mxu0
  %v416 = vadd.f32 0.0, %v415
  %417 = vmatmul.f32.gmra.mxu0 %v390
  %v418 = vpop.f32.mrf.mxu0
  %v419 = vadd.f32 0.0, %v418
  %420 = vmatmul.f32.gmra.mxu0 %v393
  %v421 = vpop.f32.mrf.mxu0
  %v422 = vadd.f32 0.0, %v421
  %423 = vmatmul.f32.gmra.mxu0 %v396
  %v424 = vpop.f32.mrf.mxu0
  %v425 = vadd.f32 0.0, %v424
  %426 = vdwg.mxu0
  %v427 = vadd.f32 %v307, %v416
  %v428 = vadd.f32 %v308, %v419
  %v429 = vadd.f32 %v309, %v422
  %v430 = vadd.f32 %v310, %v425
  %vm431 = vcmask 56320
  %v432 = vsel %vm431, %v427, -inf
  %433 = vmax.xlane.f32.xlu0 %v432
  %v434 = vpop.xlane.xlu0 %433
  %v435 = vsel %vm431, %v428, -inf
  %436 = vmax.xlane.f32.xlu0 %v435
  %v437 = vpop.xlane.xlu0 %436
  %v438 = vsel %vm431, %v429, -inf
  %439 = vmax.xlane.f32.xlu0 %v438
  %v440 = vpop.xlane.xlu0 %439
  %v441 = vsel %vm431, %v430, -inf
  %442 = vmax.xlane.f32.xlu0 %v441
  %v443 = vpop.xlane.xlu0 %442
  %v444 = vsub.f32 %v427, %v434
  %v445 = vsub.f32 %v428, %v437
  %v446 = vsub.f32 %v429, %v440
  %v447 = vsub.f32 %v430, %v443
  %v448 = vmul.f32 %v444, 1.442695
  %v449 = vpow.pop %v448
  %v450 = vmul.f32 %v445, 1.442695
  %v451 = vpow.pop %v450
  %v452 = vmul.f32 %v446, 1.442695
  %v453 = vpow.pop %v452
  %v454 = vmul.f32 %v447, 1.442695
  %v455 = vpow.pop %v454
  %v456 = vsel %vm431, %v449, 0.0
  %457 = vadd.xlane.f32.xlu0 %v456
  %v458 = vpop.xlane.xlu0 %457
  %v459 = vsel %vm431, %v451, 0.0
  %460 = vadd.xlane.f32.xlu0 %v459
  %v461 = vpop.xlane.xlu0 %460
  %v462 = vsel %vm431, %v453, 0.0
  %463 = vadd.xlane.f32.xlu0 %v462
  %v464 = vpop.xlane.xlu0 %463
  %v465 = vsel %vm431, %v455, 0.0
  %466 = vadd.xlane.f32.xlu0 %v465
  %v467 = vpop.xlane.xlu0 %466
  %v468 = vlog2.pop %v458
  %v469 = vmul.f32 %v468, 0.6931472
  %v470 = vlog2.pop %v461
  %v471 = vmul.f32 %v470, 0.6931472
  %v472 = vlog2.pop %v464
  %v473 = vmul.f32 %v472, 0.6931472
  %v474 = vlog2.pop %v467
  %v475 = vmul.f32 %v474, 0.6931472
  %v476 = vsub.f32 %v444, %v469
  %v477 = vsub.f32 %v445, %v471
  %v478 = vsub.f32 %v446, %v473
  %v479 = vsub.f32 %v447, %v475
  %480 = vst.msk [vmem:[%s10] sm:$0xff] %vm431, %v476
  %481 = vst.msk [vmem:[%s10 + $0x8] sm:$0xff] %vm431, %v477
  %482 = vst.msk [vmem:[%s10 + $0x10] sm:$0xff] %vm431, %v478
  %483 = vst.msk [vmem:[%s10 + $0x18] sm:$0xff] %vm431, %v479
  // Predicated region
  $region42: #{tpu_custom_call.1} parent=0 // pred_check
    _
  $region43: #{tpu_custom_call.1} parent=0 // pred_check_branch
    %485 = sbr.rel (0) target = $region45
  $region44: #{tpu_custom_call.1} parent=0 // pred_region
    _
  $region45: #{tpu_custom_call.1} parent=0 // pred_fallthru
    _
  // Predicated region
  $region46: #{tpu_custom_call.1} parent=0 // pred_check
    _
  $region47: #{tpu_custom_call.1} parent=0 // pred_check_branch
    %487 = sbr.rel (0) target = $region49
  $region48: #{tpu_custom_call.1} parent=0 // pred_region
    _
  $region49: #{tpu_custom_call.1} parent=0 // pred_fallthru
    _

</llo_original>
